<compile_context>
chip_gen: v7x
topology: tpu7x:2x2x1
jax: 0.10.0
libtpu: 0.0.40
codegen_flags: <defaults>
</compile_context>

<pallas_src>
import jax
import jax.numpy as jnp
from jax import lax
from jax.experimental import pallas as pl
from jax.experimental.pallas import tpu as pltpu

TEMP = 1.0          # module arg `temp`
ALPHA = 1.0         # nn.Parameter(torch.tensor(1.0)) initial value
NORM_EPS = 1e-12    # matches F.normalize's eps scale (clamp vs +eps difference is ~1e-12)


def _feature_loss_kernel(alpha_ref, other_ref, text_ref, out_ref):
    other = other_ref[...].astype(jnp.float32)
    text = text_ref[...].astype(jnp.float32)
    alpha = alpha_ref[0, 0]

    # ---- row-wise L2 normalization (F.normalize p=2 dim=1); rsqrt -> EUP slot
    tn = text * lax.rsqrt(jnp.sum(text * text, axis=1, keepdims=True) + NORM_EPS)
    on = other * lax.rsqrt(jnp.sum(other * other, axis=1, keepdims=True) + NORM_EPS)
    # "original_other_embd": normalize the already-normalized embeddings again
    on2 = on * lax.rsqrt(jnp.sum(on * on, axis=1, keepdims=True) + NORM_EPS)

    b = tn.shape[0]

    # ---- both (B, B) Gram matrices via ONE MXU matmul against stacked rows
    rhs = jnp.concatenate([tn, on], axis=0)                    # (2B, D)
    dims = (((1,), (1,)), ((), ()))                            # contract feature axis
    logits = lax.dot_general(tn, rhs, dims,
                             precision=lax.Precision.HIGHEST,
                             preferred_element_type=jnp.float32)   # (B, 2B)
    target = logits[:, :b]          # tn @ tn.T
    x = logits[:, b:]               # tn @ on.T
    if TEMP != 1.0:                 # trace-time constant; skip scaling at temp=1
        inv_t = 1.0 / TEMP
        target = target * inv_t
        x = x * inv_t

    # ---- log_softmax(x, dim=1)
    x_s = x - jnp.max(x, axis=1, keepdims=True)
    log_q = x_s - jnp.log(jnp.sum(jnp.exp(x_s), axis=1, keepdims=True))

    # ---- softmax(target, dim=1) and its log
    t_s = target - jnp.max(target, axis=1, keepdims=True)
    e_t = jnp.exp(t_s)
    sum_t = jnp.sum(e_t, axis=1, keepdims=True)
    p = e_t * pl.reciprocal(sum_t, approx=False)      # EUP reciprocal (exact)
    log_p = t_s - jnp.log(sum_t)

    # ---- F.kl_div(log_q, p, reduction='batchmean') = sum(p*(log p - log q)) / B
    similarity = jnp.sum(p * (log_p - log_q)) * (1.0 / b)

    # ---- F.mse_loss(on, on2) (mean over all elements; ~0 by construction)
    d = on - on2
    uniqueness = jnp.sum(d * d) * (1.0 / (d.shape[0] * d.shape[1]))

    out_ref[0, 0] = alpha * similarity + (1.0 - alpha) * uniqueness


def feature_loss_advanced(other_embd, text_embd, alpha=ALPHA):
    assert other_embd.shape == text_embd.shape and other_embd.ndim == 2
    alpha_arr = jnp.full((1, 1), alpha, dtype=jnp.float32)
    return pl.pallas_call(
        _feature_loss_kernel,
        out_shape=jax.ShapeDtypeStruct((1, 1), jnp.float32),
        in_specs=[
            pl.BlockSpec(memory_space=pltpu.MemorySpace.SMEM),   # alpha scalar
            pl.BlockSpec(other_embd.shape, lambda: (0, 0)),      # full [B, D] block
            pl.BlockSpec(text_embd.shape, lambda: (0, 0)),       # full [B, D] block
        ],
        # scalar result lives in SMEM -> no masked (1,1) VMEM store / output DMA
        out_specs=pl.BlockSpec(memory_space=pltpu.MemorySpace.SMEM),
        compiler_params=pltpu.CompilerParams(vmem_limit_bytes=32 * 1024 * 1024),
    )(alpha_arr, other_embd, text_embd)


def _reference(other_embd, text_embd, alpha=ALPHA, temp=TEMP):
    # pure-JAX mirror of the PyTorch module
    def l2norm(v):
        n = jnp.linalg.norm(v, axis=1, keepdims=True)
        return v / jnp.maximum(n, 1e-12)

    tn = l2norm(text_embd)
    on = l2norm(other_embd)
    on2 = l2norm(on)
    target = jnp.matmul(tn, tn.T, precision=lax.Precision.HIGHEST)
    x = jnp.matmul(tn, on.T, precision=lax.Precision.HIGHEST)
    log_q = jax.nn.log_softmax(x / temp, axis=1)
    p = jax.nn.softmax(target / temp, axis=1)
    sim = jnp.sum(p * (jnp.log(p) - log_q)) / x.shape[0]    # kl_div 'batchmean'
    uniq = jnp.mean((on - on2) ** 2)                        # mse_loss 'mean'
    return alpha * sim + (1.0 - alpha) * uniq


if __name__ == "__main__":
    key = jax.random.PRNGKey(0)
    k1, k2 = jax.random.split(key)
    B, D = 8, 32  # (batch, embedding_dim) — small embeddings consistent with the module
    other_embd = jax.random.normal(k1, (B, D), dtype=jnp.float32)
    text_embd = jax.random.normal(k2, (B, D), dtype=jnp.float32)

    out = feature_loss_advanced(other_embd, text_embd)
    out = jax.block_until_ready(out)

    ref = _reference(other_embd, text_embd)
    assert jnp.allclose(out[0, 0], ref, atol=1e-4, rtol=1e-4), (out, ref)
    print("KERNEL_OK")
</pallas_src>

<mosaic_0001>
module attributes {stable_mosaic.version = 11 : i64} {
  func.func @_feature_loss_kernel(%arg0: memref<1x1xf32, #tpu.memory_space<smem>>, %arg1: memref<8x32xf32, #tpu.memory_space<vmem>>, %arg2: memref<8x32xf32, #tpu.memory_space<vmem>>, %arg3: memref<1x1xf32, #tpu.memory_space<smem>>) attributes {dimension_semantics = [], scalar_prefetch = 0 : i64, scratch_operands = 0 : i64, tpu.core_type = #tpu.core_type<tc>} {
    %c0 = arith.constant 0 : index
    %c0_0 = arith.constant 0 : index
    %0 = vector.load %arg1[%c0, %c0_0] : memref<8x32xf32, #tpu.memory_space<vmem>>, vector<8x32xf32>
    %c0_1 = arith.constant 0 : index
    %c0_2 = arith.constant 0 : index
    %1 = vector.load %arg2[%c0_1, %c0_2] : memref<8x32xf32, #tpu.memory_space<vmem>>, vector<8x32xf32>
    %c0_3 = arith.constant 0 : index
    %c0_4 = arith.constant 0 : index
    %2 = memref.load %arg0[%c0_3, %c0_4] : memref<1x1xf32, #tpu.memory_space<smem>>
    %3 = arith.mulf %1, %1 : vector<8x32xf32>
    %cst = arith.constant dense<0.000000e+00> : vector<8xf32>
    %4 = vector.multi_reduction <add>, %3, %cst [1] : vector<8x32xf32> to vector<8xf32>
    %5 = vector.shape_cast %4 : vector<8xf32> to vector<8x1xf32>
    %cst_5 = arith.constant 9.99999996E-13 : f32
    %6 = vector.broadcast %cst_5 : f32 to vector<8x1xf32>
    %7 = arith.addf %5, %6 : vector<8x1xf32>
    %8 = math.rsqrt %7 : vector<8x1xf32>
    %9 = vector.broadcast %8 : vector<8x1xf32> to vector<8x32xf32>
    %10 = arith.mulf %1, %9 : vector<8x32xf32>
    %11 = arith.mulf %0, %0 : vector<8x32xf32>
    %cst_6 = arith.constant dense<0.000000e+00> : vector<8xf32>
    %12 = vector.multi_reduction <add>, %11, %cst_6 [1] : vector<8x32xf32> to vector<8xf32>
    %13 = vector.shape_cast %12 : vector<8xf32> to vector<8x1xf32>
    %cst_7 = arith.constant 9.99999996E-13 : f32
    %14 = vector.broadcast %cst_7 : f32 to vector<8x1xf32>
    %15 = arith.addf %13, %14 : vector<8x1xf32>
    %16 = math.rsqrt %15 : vector<8x1xf32>
    %17 = vector.broadcast %16 : vector<8x1xf32> to vector<8x32xf32>
    %18 = arith.mulf %0, %17 : vector<8x32xf32>
    %19 = arith.mulf %18, %18 : vector<8x32xf32>
    %cst_8 = arith.constant dense<0.000000e+00> : vector<8xf32>
    %20 = vector.multi_reduction <add>, %19, %cst_8 [1] : vector<8x32xf32> to vector<8xf32>
    %21 = vector.shape_cast %20 : vector<8xf32> to vector<8x1xf32>
    %cst_9 = arith.constant 9.99999996E-13 : f32
    %22 = vector.broadcast %cst_9 : f32 to vector<8x1xf32>
    %23 = arith.addf %21, %22 : vector<8x1xf32>
    %24 = math.rsqrt %23 : vector<8x1xf32>
    %25 = vector.broadcast %24 : vector<8x1xf32> to vector<8x32xf32>
    %26 = arith.mulf %18, %25 : vector<8x32xf32>
    %27 = tpu.concatenate %10, %18 in 0 : vector<8x32xf32>, vector<8x32xf32> -> vector<16x32xf32>
    %cst_10 = arith.constant dense<0.000000e+00> : vector<8x16xf32>
    %28 = tpu.matmul %10, %27, %cst_10 {dimension_numbers = #tpu.dot_dimension_numbers<[1], [1], [0], [0], [0, 0, 1, 0], [], []>, precision = #tpu.contract_precision<fp32>} : vector<8x32xf32>, vector<16x32xf32>, vector<8x16xf32> -> vector<8x16xf32>
    %29 = vector.extract_strided_slice %28 {offsets = [0, 0], sizes = [8, 8], strides = [1, 1]} : vector<8x16xf32> to vector<8x8xf32>
    %30 = vector.extract_strided_slice %28 {offsets = [0, 8], sizes = [8, 8], strides = [1, 1]} : vector<8x16xf32> to vector<8x8xf32>
    %cst_11 = arith.constant dense<0xFF800000> : vector<8xf32>
    %31 = vector.multi_reduction <maximumf>, %30, %cst_11 [1] : vector<8x8xf32> to vector<8xf32>
    %32 = vector.shape_cast %31 : vector<8xf32> to vector<8x1xf32>
    %33 = vector.broadcast %32 : vector<8x1xf32> to vector<8x8xf32>
    %34 = arith.subf %30, %33 : vector<8x8xf32>
    %35 = math.exp %34 : vector<8x8xf32>
    %cst_12 = arith.constant dense<0.000000e+00> : vector<8xf32>
    %36 = vector.multi_reduction <add>, %35, %cst_12 [1] : vector<8x8xf32> to vector<8xf32>
    %37 = vector.shape_cast %36 : vector<8xf32> to vector<8x1xf32>
    %38 = math.log %37 : vector<8x1xf32>
    %39 = vector.broadcast %38 : vector<8x1xf32> to vector<8x8xf32>
    %40 = arith.subf %34, %39 : vector<8x8xf32>
    %cst_13 = arith.constant dense<0xFF800000> : vector<8xf32>
    %41 = vector.multi_reduction <maximumf>, %29, %cst_13 [1] : vector<8x8xf32> to vector<8xf32>
    %42 = vector.shape_cast %41 : vector<8xf32> to vector<8x1xf32>
    %43 = vector.broadcast %42 : vector<8x1xf32> to vector<8x8xf32>
    %44 = arith.subf %29, %43 : vector<8x8xf32>
    %45 = math.exp %44 : vector<8x8xf32>
    %cst_14 = arith.constant dense<0.000000e+00> : vector<8xf32>
    %46 = vector.multi_reduction <add>, %45, %cst_14 [1] : vector<8x8xf32> to vector<8xf32>
    %47 = vector.shape_cast %46 : vector<8xf32> to vector<8x1xf32>
    %48 = tpu.reciprocal %47 : vector<8x1xf32> -> vector<8x1xf32>
    %49 = vector.broadcast %48 : vector<8x1xf32> to vector<8x8xf32>
    %50 = arith.mulf %45, %49 : vector<8x8xf32>
    %51 = math.log %47 : vector<8x1xf32>
    %52 = vector.broadcast %51 : vector<8x1xf32> to vector<8x8xf32>
    %53 = arith.subf %44, %52 : vector<8x8xf32>
    %54 = arith.subf %53, %40 : vector<8x8xf32>
    %55 = arith.mulf %50, %54 : vector<8x8xf32>
    %56 = vector.shape_cast %55 : vector<8x8xf32> to vector<1x8x8xf32>
    %cst_15 = arith.constant dense<0.000000e+00> : vector<1xf32>
    %57 = vector.multi_reduction <add>, %56, %cst_15 [1, 2] : vector<1x8x8xf32> to vector<1xf32>
    %58 = vector.shape_cast %57 : vector<1xf32> to vector<1x1x1xf32>
    %59 = vector.extract %58[0, 0, 0] : f32 from vector<1x1x1xf32>
    %cst_16 = arith.constant 1.250000e-01 : f32
    %60 = arith.mulf %59, %cst_16 : f32
    %61 = arith.subf %18, %26 : vector<8x32xf32>
    %62 = arith.mulf %61, %61 : vector<8x32xf32>
    %63 = vector.shape_cast %62 : vector<8x32xf32> to vector<1x8x32xf32>
    %cst_17 = arith.constant dense<0.000000e+00> : vector<1xf32>
    %64 = vector.multi_reduction <add>, %63, %cst_17 [1, 2] : vector<1x8x32xf32> to vector<1xf32>
    %65 = vector.shape_cast %64 : vector<1xf32> to vector<1x1x1xf32>
    %66 = vector.extract %65[0, 0, 0] : f32 from vector<1x1x1xf32>
    %cst_18 = arith.constant 3.906250e-03 : f32
    %67 = arith.mulf %66, %cst_18 : f32
    %68 = arith.mulf %2, %60 : f32
    %cst_19 = arith.constant 1.000000e+00 : f32
    %69 = arith.subf %cst_19, %2 : f32
    %70 = arith.mulf %69, %67 : f32
    %71 = arith.addf %68, %70 : f32
    %c0_20 = arith.constant 0 : index
    %c0_21 = arith.constant 0 : index
    %72 = memref.load %arg3[%c0_20, %c0_21] : memref<1x1xf32, #tpu.memory_space<smem>>
    memref.store %71, %arg3[%c0_20, %c0_21] : memref<1x1xf32, #tpu.memory_space<smem>>
    return
  }
}

</mosaic_0001>

<llo_original>
// kernel: tpu_custom_call.1
$region0: #{tpu_custom_call.1}
  #allocation0 [shape = 'u32[]', space=smem, size = 0x4, offset = 0x4, fixed_abs, tag = 'smem constant byte address 0x4 - core index']
  #allocation1 [shape = 'u32[144,128]{1,0:T(1,128)}', space=vmem, size = 0x12000, scoped, tag = 'internal scratch']
  #allocation2 [shape = 'f32[1,1]{1,0:T(1,128)S(6)}', space=smem, size = 0x200, scoped, tag = 'scoped memory for tpu_custom_call.1']
  %s0 = inlined_call_operand.<no memory space> [shape: f32[1,1], index: 0, kind: input, shape index: {}]
  %s1 = inlined_call_operand.hbm [shape: f32[8,32], index: 1, kind: input, shape index: {}]
  %s2 = inlined_call_operand.hbm [shape: f32[8,32], index: 2, kind: input, shape index: {}]
  %s3 = inlined_call_operand.hbm [shape: f32[1,1], index: 3, kind: output, shape index: {}]
  %s4 = sld [smem:[#allocation0]]
  $region30: #{tpu_custom_call.1} parent=0
    _
  %s6 = ssub.s32 1, %s4
  %s7 = scalar_select 0, %s6, %s4
  %8 = sst [smem:[#allocation2]] %s0
  $region1: #{tpu_custom_call.1} parent=0
    #allocation3 [shape = 'u8[4096]{0}', space=vmem, size = 0x1000, scoped, tag = 'input window, operand 1, single buffered']
    #allocation4 [shape = 's32[1]{0}', space=sflag, size = 0x4, scoped, tag = 'scoped memory for tpu_custom_call.1']
    #allocation5 [shape = 's32[1]{0}', space=sflag, size = 0x4, scoped, tag = 'scoped memory for tpu_custom_call.1']
    #allocation6 [shape = 'u8[4096]{0}', space=vmem, size = 0x1000, scoped, tag = 'input window, operand 2, single buffered']
    #allocation7 [shape = 's32[1]{0}', space=sflag, size = 0x4, scoped, tag = 'scoped memory for tpu_custom_call.1']
    #allocation8 [shape = 'u8[512]{0}', space=smem, size = 0x200, scoped, tag = 'output window, operand 0, single buffered']
    %9 = vsyncpa [#allocation4], 0
    %10 = vsyncpa [#allocation7], 0
    %11 = vsyncpa [#allocation5], 0
    // Predicated region
    $region2: #{tpu_custom_call.1} parent=1 // pred_check
      _
    $region3: #{tpu_custom_call.1} parent=1 // pred_check_branch
      %13 = sbr.rel (0) target = $region5
    $region4: #{tpu_custom_call.1} parent=1 // pred_region
      _
    $region5: #{tpu_custom_call.1} parent=1 // pred_fallthru
      _
    // Predicated region
    $region6: #{tpu_custom_call.1} parent=1 // pred_check
      _
    $region7: #{tpu_custom_call.1} parent=1 // pred_check_branch
      %15 = sbr.rel (0) target = $region9
    $region8: #{tpu_custom_call.1} parent=1 // pred_region
      %s17 = ssub.s32 128, 128
      %18 = vsyncadd [#allocation4], %s17
      %s20 = sshll.u32 [#allocation3], 4
      %s21 = int_to_ptr.vmem [resolvable:$true] %s20
      %23 = dma.hbm_to_vmem [thread:$0]  %s1, 128, %s21, [#allocation4]
    $region9: #{tpu_custom_call.1} parent=1 // pred_fallthru
      _
    // Predicated region
    $region10: #{tpu_custom_call.1} parent=1 // pred_check
      _
    $region11: #{tpu_custom_call.1} parent=1 // pred_check_branch
      %25 = sbr.rel (0) target = $region13
    $region12: #{tpu_custom_call.1} parent=1 // pred_region
      %s27 = ssub.s32 128, 128
      %28 = vsyncadd [#allocation7], %s27
      %s30 = sshll.u32 [#allocation6], 4
      %s31 = int_to_ptr.vmem [resolvable:$true] %s30
      %33 = dma.hbm_to_vmem [thread:$0]  %s2, 128, %s31, [#allocation7]
    $region13: #{tpu_custom_call.1} parent=1 // pred_fallthru
      _
    // Predicated region
    $region14: #{tpu_custom_call.1} parent=1 // pred_check
      _
    $region15: #{tpu_custom_call.1} parent=1 // pred_check_branch
      %35 = sbr.rel (0) target = $region17
    $region16: #{tpu_custom_call.1} parent=1 // pred_region
      %36 = dma.done [#allocation4], 128
    $region17: #{tpu_custom_call.1} parent=1 // pred_fallthru
      _
    // Predicated region
    $region18: #{tpu_custom_call.1} parent=1 // pred_check
      _
    $region19: #{tpu_custom_call.1} parent=1 // pred_check_branch
      %38 = sbr.rel (0) target = $region21
    $region20: #{tpu_custom_call.1} parent=1 // pred_region
      %39 = dma.done [#allocation7], 128
    $region21: #{tpu_custom_call.1} parent=1 // pred_fallthru
      _
    %v40 = vld [vmem:[#allocation3] sm:$0xff]
    %v41 = vld [vmem:[#allocation6] sm:$0xff]
    %s42 = sld [smem:[#allocation2]]
    %v43 = vmul.f32 %v41, %v41
    %vm44 = vcmask 261120
    %v45 = vsel %vm44, %v43, 0.0
    %46 = vadd.xlane.f32.xlu0 %v45
    %v47 = vpop.xlane.xlu0 %46
    %v48 = vadd.f32 %v47, 1e-12
    %v49 = vrsqrt.pop %v48
    %v50 = vmul.f32 %v41, %v49
    %v51 = vmul.f32 %v40, %v40
    %v52 = vsel %vm44, %v51, 0.0
    %53 = vadd.xlane.f32.xlu0 %v52
    %v54 = vpop.xlane.xlu0 %53
    %v55 = vadd.f32 %v54, 1e-12
    %v56 = vrsqrt.pop %v55
    %v57 = vmul.f32 %v40, %v56
    %v58 = vmul.f32 %v57, %v57
    %v59 = vsel %vm44, %v58, 0.0
    %60 = vadd.xlane.f32.xlu0 %v59
    %v61 = vpop.xlane.xlu0 %60
    %v62 = vadd.f32 %v61, 1e-12
    %v63 = vrsqrt.pop %v62
    %v64 = vmul.f32 %v57, %v63
    %v66 = vsel %vm44, %v50, 0
    %v69 = vsel %vm44, %v57, 0
    %71 = vmatprep.subr.mxu0 0.0
    %v72 = vand.u32 %v66, 4294901760
    %73 = vmatpush1.xpose.msra.mxu0 %v72
    %74 = vmatprep.subr.mxu0 0.0
    %v75 = vand.u32 %v69, 4294901760
    %76 = vmatpush1.xpose.msra.mxu0 %v75
    %77 = vmatprep.subr.mxu0 0.0
    %78 = vmatpush1.xpose.msra.mxu0 0.0
    %79 = vmatprep.subr.mxu0 0.0
    %80 = vmatpush1.xpose.msra.mxu0 0.0
    %81 = vmatprep.subr.mxu0 0.0
    %82 = vmatpush1.xpose.msra.mxu0 0.0
    %83 = vmatprep.subr.mxu0 0.0
    %84 = vmatpush1.xpose.msra.mxu0 0.0
    %85 = vmatprep.subr.mxu0 0.0
    %86 = vmatpush1.xpose.msra.mxu0 0.0
    %87 = vmatprep.subr.mxu0 0.0
    %88 = vmatpush1.xpose.msra.mxu0 0.0
    %89 = vmatprep.subr.mxu0 0.0
    %90 = vmatpush1.xpose.msra.mxu0 0.0
    %91 = vmatprep.subr.mxu0 0.0
    %92 = vmatpush1.xpose.msra.mxu0 0.0
    %93 = vmatprep.subr.mxu0 0.0
    %94 = vmatpush1.xpose.msra.mxu0 0.0
    %95 = vmatprep.subr.mxu0 0.0
    %96 = vmatpush1.xpose.msra.mxu0 0.0
    %97 = vmatprep.subr.mxu0 0.0
    %98 = vmatpush1.xpose.msra.mxu0 0.0
    %99 = vmatprep.subr.mxu0 0.0
    %100 = vmatpush1.xpose.msra.mxu0 0.0
    %101 = vmatprep.subr.mxu0 0.0
    %102 = vmatpush1.xpose.msra.mxu0 0.0
    %103 = vmatprep.subr.mxu0 0.0
    %104 = vmatpush1.xpose.msra.mxu0 0.0
    %105 = vmatprep.subr.mxu0 0.0
    %106 = vmatpush1.xpose.msra.mxu0 0.0
    %107 = vmatprep.subr.mxu0 0.0
    %108 = vmatpush1.xpose.msra.mxu0 0.0
    %109 = vmatprep.subr.mxu0 0.0
    %110 = vmatpush1.xpose.msra.mxu0 0.0
    %111 = vmatprep.subr.mxu0 0.0
    %112 = vmatpush1.xpose.msra.mxu0 0.0
    %113 = vmatprep.subr.mxu0 0.0
    %114 = vmatpush1.xpose.msra.mxu0 0.0
    %115 = vmatprep.subr.mxu0 0.0
    %116 = vmatpush1.xpose.msra.mxu0 0.0
    %117 = vmatprep.subr.mxu0 0.0
    %118 = vmatpush1.xpose.msra.mxu0 0.0
    %119 = vmatprep.subr.mxu0 0.0
    %120 = vmatpush1.xpose.msra.mxu0 0.0
    %121 = vmatprep.subr.mxu0 0.0
    %122 = vmatpush1.xpose.msra.mxu0 0.0
    %123 = vmatprep.subr.mxu0 0.0
    %124 = vmatpush1.xpose.msra.mxu0 0.0
    %125 = vmatprep.subr.mxu0 0.0
    %126 = vmatpush1.xpose.msra.mxu0 0.0
    %127 = vmatprep.subr.mxu0 0.0
    %128 = vmatpush1.xpose.msra.mxu0 0.0
    %129 = vmatprep.subr.mxu0 0.0
    %130 = vmatpush1.xpose.msra.mxu0 0.0
    %131 = vmatprep.subr.mxu0 0.0
    %132 = vmatpush1.xpose.msra.mxu0 0.0
    %133 = vmatprep.subr.mxu0 0.0
    %134 = vmatpush1.xpose.msra.mxu0 0.0
    %135 = vmatprep.subr.mxu0 0.0
    %136 = vmatpush1.xpose.msra.mxu0 0.0
    %137 = vmatprep.mubr.f32.mxu0 0.0
    %v138 = vand.u32 %v66, 4294901760
    %v139 = vsub.f32 %v66, %v138
    %v140 = vand.u32 %v139, 4294901760
    %v141 = vsub.f32 %v139, %v140
    %v142 = vand.u32 %v141, 4294901760
    %143 = vmatmul.mubr.f32.gmra.mrb[0].mxu0 %v142
    %v144 = vpop.f32.mrb[0].mxu0
    %v145 = vadd.f32 0.0, %v144
    %v146 = vpop.f32.mrb[0].mxu0
    %147 = vdwg.mxu0
    %148 = vmatprep.subr.mxu0 0.0
    %v149 = vand.u32 %v66, 4294901760
    %v150 = vsub.f32 %v66, %v149
    %v151 = vand.u32 %v150, 4294901760
    %v152 = vsub.f32 %v150, %v151
    %v153 = vand.u32 %v152, 4294901760
    %154 = vmatpush1.xpose.msra.mxu0 %v153
    %155 = vmatprep.subr.mxu0 0.0
    %v156 = vand.u32 %v69, 4294901760
    %v157 = vsub.f32 %v69, %v156
    %v158 = vand.u32 %v157, 4294901760
    %v159 = vsub.f32 %v157, %v158
    %v160 = vand.u32 %v159, 4294901760
    %161 = vmatpush1.xpose.msra.mxu0 %v160
    %162 = vmatprep.subr.mxu0 0.0
    %163 = vmatpush1.xpose.msra.mxu0 0.0
    %164 = vmatprep.subr.mxu0 0.0
    %165 = vmatpush1.xpose.msra.mxu0 0.0
    %166 = vmatprep.subr.mxu0 0.0
    %167 = vmatpush1.xpose.msra.mxu0 0.0
    %168 = vmatprep.subr.mxu0 0.0
    %169 = vmatpush1.xpose.msra.mxu0 0.0
    %170 = vmatprep.subr.mxu0 0.0
    %171 = vmatpush1.xpose.msra.mxu0 0.0
    %172 = vmatprep.subr.mxu0 0.0
    %173 = vmatpush1.xpose.msra.mxu0 0.0
    %174 = vmatprep.subr.mxu0 0.0
    %175 = vmatpush1.xpose.msra.mxu0 0.0
    %176 = vmatprep.subr.mxu0 0.0
    %177 = vmatpush1.xpose.msra.mxu0 0.0
    %178 = vmatprep.subr.mxu0 0.0
    %179 = vmatpush1.xpose.msra.mxu0 0.0
    %180 = vmatprep.subr.mxu0 0.0
    %181 = vmatpush1.xpose.msra.mxu0 0.0
    %182 = vmatprep.subr.mxu0 0.0
    %183 = vmatpush1.xpose.msra.mxu0 0.0
    %184 = vmatprep.subr.mxu0 0.0
    %185 = vmatpush1.xpose.msra.mxu0 0.0
    %186 = vmatprep.subr.mxu0 0.0
    %187 = vmatpush1.xpose.msra.mxu0 0.0
    %188 = vmatprep.subr.mxu0 0.0
    %189 = vmatpush1.xpose.msra.mxu0 0.0
    %190 = vmatprep.subr.mxu0 0.0
    %191 = vmatpush1.xpose.msra.mxu0 0.0
    %192 = vmatprep.subr.mxu0 0.0
    %193 = vmatpush1.xpose.msra.mxu0 0.0
    %194 = vmatprep.subr.mxu0 0.0
    %195 = vmatpush1.xpose.msra.mxu0 0.0
    %196 = vmatprep.subr.mxu0 0.0
    %197 = vmatpush1.xpose.msra.mxu0 0.0
    %198 = vmatprep.subr.mxu0 0.0
    %199 = vmatpush1.xpose.msra.mxu0 0.0
    %200 = vmatprep.subr.mxu0 0.0
    %201 = vmatpush1.xpose.msra.mxu0 0.0
    %202 = vmatprep.subr.mxu0 0.0
    %203 = vmatpush1.xpose.msra.mxu0 0.0
    %204 = vmatprep.subr.mxu0 0.0
    %205 = vmatpush1.xpose.msra.mxu0 0.0
    %206 = vmatprep.subr.mxu0 0.0
    %207 = vmatpush1.xpose.msra.mxu0 0.0
    %208 = vmatprep.subr.mxu0 0.0
    %209 = vmatpush1.xpose.msra.mxu0 0.0
    %210 = vmatprep.subr.mxu0 0.0
    %211 = vmatpush1.xpose.msra.mxu0 0.0
    %212 = vmatprep.subr.mxu0 0.0
    %213 = vmatpush1.xpose.msra.mxu0 0.0
    %214 = vmatprep.subr.mxu0 0.0
    %215 = vmatpush1.xpose.msra.mxu0 0.0
    %216 = vmatprep.subr.mxu0 0.0
    %217 = vmatpush1.xpose.msra.mxu0 0.0
    %218 = vmatprep.subr.mxu0 0.0
    %219 = vmatpush1.xpose.msra.mxu0 0.0
    %220 = vmatprep.subr.mxu0 0.0
    %221 = vmatpush1.xpose.msra.mxu0 0.0
    %222 = vmatprep.mubr.f32.mxu0 0.0
    %v223 = vand.u32 %v66, 4294901760
    %224 = vmatmul.mubr.f32.gmra.mrb[0].mxu0 %v223
    %v225 = vpop.f32.mrb[0].mxu0
    %v226 = vadd.f32 %v145, %v225
    %v227 = vpop.f32.mrb[0].mxu0
    %228 = vdwg.mxu0
    %229 = vmatprep.subr.mxu0 0.0
    %v230 = vand.u32 %v66, 4294901760
    %v231 = vsub.f32 %v66, %v230
    %232 = vmatpush1.xpose.msra.mxu0 %v231
    %233 = vmatprep.subr.mxu0 0.0
    %v234 = vand.u32 %v69, 4294901760
    %v235 = vsub.f32 %v69, %v234
    %236 = vmatpush1.xpose.msra.mxu0 %v235
    %237 = vmatprep.subr.mxu0 0.0
    %238 = vmatpush1.xpose.msra.mxu0 0.0
    %239 = vmatprep.subr.mxu0 0.0
    %240 = vmatpush1.xpose.msra.mxu0 0.0
    %241 = vmatprep.subr.mxu0 0.0
    %242 = vmatpush1.xpose.msra.mxu0 0.0
    %243 = vmatprep.subr.mxu0 0.0
    %244 = vmatpush1.xpose.msra.mxu0 0.0
    %245 = vmatprep.subr.mxu0 0.0
    %246 = vmatpush1.xpose.msra.mxu0 0.0
    %247 = vmatprep.subr.mxu0 0.0
    %248 = vmatpush1.xpose.msra.mxu0 0.0
    %249 = vmatprep.subr.mxu0 0.0
    %250 = vmatpush1.xpose.msra.mxu0 0.0
    %251 = vmatprep.subr.mxu0 0.0
    %252 = vmatpush1.xpose.msra.mxu0 0.0
    %253 = vmatprep.subr.mxu0 0.0
    %254 = vmatpush1.xpose.msra.mxu0 0.0
    %255 = vmatprep.subr.mxu0 0.0
    %256 = vmatpush1.xpose.msra.mxu0 0.0
    %257 = vmatprep.subr.mxu0 0.0
    %258 = vmatpush1.xpose.msra.mxu0 0.0
    %259 = vmatprep.subr.mxu0 0.0
    %260 = vmatpush1.xpose.msra.mxu0 0.0
    %261 = vmatprep.subr.mxu0 0.0
    %262 = vmatpush1.xpose.msra.mxu0 0.0
    %263 = vmatprep.subr.mxu0 0.0
    %264 = vmatpush1.xpose.msra.mxu0 0.0
    %265 = vmatprep.subr.mxu0 0.0
    %266 = vmatpush1.xpose.msra.mxu0 0.0
    %267 = vmatprep.subr.mxu0 0.0
    %268 = vmatpush1.xpose.msra.mxu0 0.0
    %269 = vmatprep.subr.mxu0 0.0
    %270 = vmatpush1.xpose.msra.mxu0 0.0
    %271 = vmatprep.subr.mxu0 0.0
    %272 = vmatpush1.xpose.msra.mxu0 0.0
    %273 = vmatprep.subr.mxu0 0.0
    %274 = vmatpush1.xpose.msra.mxu0 0.0
    %275 = vmatprep.subr.mxu0 0.0
    %276 = vmatpush1.xpose.msra.mxu0 0.0
    %277 = vmatprep.subr.mxu0 0.0
    %278 = vmatpush1.xpose.msra.mxu0 0.0
    %279 = vmatprep.subr.mxu0 0.0
    %280 = vmatpush1.xpose.msra.mxu0 0.0
    %281 = vmatprep.subr.mxu0 0.0
    %282 = vmatpush1.xpose.msra.mxu0 0.0
    %283 = vmatprep.subr.mxu0 0.0
    %284 = vmatpush1.xpose.msra.mxu0 0.0
    %285 = vmatprep.subr.mxu0 0.0
    %286 = vmatpush1.xpose.msra.mxu0 0.0
    %287 = vmatprep.subr.mxu0 0.0
    %288 = vmatpush1.xpose.msra.mxu0 0.0
    %289 = vmatprep.subr.mxu0 0.0
    %290 = vmatpush1.xpose.msra.mxu0 0.0
    %291 = vmatprep.subr.mxu0 0.0
    %292 = vmatpush1.xpose.msra.mxu0 0.0
    %293 = vmatprep.subr.mxu0 0.0
    %294 = vmatpush1.xpose.msra.mxu0 0.0
    %295 = vmatprep.subr.mxu0 0.0
    %296 = vmatpush1.xpose.msra.mxu0 0.0
    %297 = vmatprep.mubr.f32.mxu0 0.0
    %v298 = vand.u32 %v66, 4294901760
    %v299 = vsub.f32 %v66, %v298
    %300 = vmatmul.mubr.f32.gmra.mrb[0].mxu0 %v299
    %v301 = vpop.f32.mrb[0].mxu0
    %v302 = vadd.f32 %v226, %v301
    %v303 = vpop.f32.mrb[0].mxu0
    %304 = vdwg.mxu0
    %305 = vmatprep.subr.mxu0 0.0
    %v306 = vand.u32 %v66, 4294901760
    %307 = vmatpush1.xpose.msra.mxu0 %v306
    %308 = vmatprep.subr.mxu0 0.0
    %v309 = vand.u32 %v69, 4294901760
    %310 = vmatpush1.xpose.msra.mxu0 %v309
    %311 = vmatprep.subr.mxu0 0.0
    %312 = vmatpush1.xpose.msra.mxu0 0.0
    %313 = vmatprep.subr.mxu0 0.0
    %314 = vmatpush1.xpose.msra.mxu0 0.0
    %315 = vmatprep.subr.mxu0 0.0
    %316 = vmatpush1.xpose.msra.mxu0 0.0
    %317 = vmatprep.subr.mxu0 0.0
    %318 = vmatpush1.xpose.msra.mxu0 0.0
    %319 = vmatprep.subr.mxu0 0.0
    %320 = vmatpush1.xpose.msra.mxu0 0.0
    %321 = vmatprep.subr.mxu0 0.0
    %322 = vmatpush1.xpose.msra.mxu0 0.0
    %323 = vmatprep.subr.mxu0 0.0
    %324 = vmatpush1.xpose.msra.mxu0 0.0
    %325 = vmatprep.subr.mxu0 0.0
    %326 = vmatpush1.xpose.msra.mxu0 0.0
    %327 = vmatprep.subr.mxu0 0.0
    %328 = vmatpush1.xpose.msra.mxu0 0.0
    %329 = vmatprep.subr.mxu0 0.0
    %330 = vmatpush1.xpose.msra.mxu0 0.0
    %331 = vmatprep.subr.mxu0 0.0
    %332 = vmatpush1.xpose.msra.mxu0 0.0
    %333 = vmatprep.subr.mxu0 0.0
    %334 = vmatpush1.xpose.msra.mxu0 0.0
    %335 = vmatprep.subr.mxu0 0.0
    %336 = vmatpush1.xpose.msra.mxu0 0.0
    %337 = vmatprep.subr.mxu0 0.0
    %338 = vmatpush1.xpose.msra.mxu0 0.0
    %339 = vmatprep.subr.mxu0 0.0
    %340 = vmatpush1.xpose.msra.mxu0 0.0
    %341 = vmatprep.subr.mxu0 0.0
    %342 = vmatpush1.xpose.msra.mxu0 0.0
    %343 = vmatprep.subr.mxu0 0.0
    %344 = vmatpush1.xpose.msra.mxu0 0.0
    %345 = vmatprep.subr.mxu0 0.0
    %346 = vmatpush1.xpose.msra.mxu0 0.0
    %347 = vmatprep.subr.mxu0 0.0
    %348 = vmatpush1.xpose.msra.mxu0 0.0
    %349 = vmatprep.subr.mxu0 0.0
    %350 = vmatpush1.xpose.msra.mxu0 0.0
    %351 = vmatprep.subr.mxu0 0.0
    %352 = vmatpush1.xpose.msra.mxu0 0.0
    %353 = vmatprep.subr.mxu0 0.0
    %354 = vmatpush1.xpose.msra.mxu0 0.0
    %355 = vmatprep.subr.mxu0 0.0
    %356 = vmatpush1.xpose.msra.mxu0 0.0
    %357 = vmatprep.subr.mxu0 0.0
    %358 = vmatpush1.xpose.msra.mxu0 0.0
    %359 = vmatprep.subr.mxu0 0.0
    %360 = vmatpush1.xpose.msra.mxu0 0.0
    %361 = vmatprep.subr.mxu0 0.0
    %362 = vmatpush1.xpose.msra.mxu0 0.0
    %363 = vmatprep.subr.mxu0 0.0
    %364 = vmatpush1.xpose.msra.mxu0 0.0
    %365 = vmatprep.subr.mxu0 0.0
    %366 = vmatpush1.xpose.msra.mxu0 0.0
    %367 = vmatprep.subr.mxu0 0.0
    %368 = vmatpush1.xpose.msra.mxu0 0.0
    %369 = vmatprep.subr.mxu0 0.0
    %370 = vmatpush1.xpose.msra.mxu0 0.0
    %371 = vmatprep.mubr.f32.mxu0 0.0
    %v372 = vand.u32 %v66, 4294901760
    %v373 = vsub.f32 %v66, %v372
    %v374 = vand.u32 %v373, 4294901760
    %375 = vmatmul.mubr.f32.gmra.mrb[0].mxu0 %v374
    %v376 = vpop.f32.mrb[0].mxu0
    %v377 = vadd.f32 %v302, %v376
    %v378 = vpop.f32.mrb[0].mxu0
    %379 = vdwg.mxu0
    %380 = vmatprep.subr.mxu0 0.0
    %v381 = vand.u32 %v66, 4294901760
    %v382 = vsub.f32 %v66, %v381
    %v383 = vand.u32 %v382, 4294901760
    %384 = vmatpush1.xpose.msra.mxu0 %v383
    %385 = vmatprep.subr.mxu0 0.0
    %v386 = vand.u32 %v69, 4294901760
    %v387 = vsub.f32 %v69, %v386
    %v388 = vand.u32 %v387, 4294901760
    %389 = vmatpush1.xpose.msra.mxu0 %v388
    %390 = vmatprep.subr.mxu0 0.0
    %391 = vmatpush1.xpose.msra.mxu0 0.0
    %392 = vmatprep.subr.mxu0 0.0
    %393 = vmatpush1.xpose.msra.mxu0 0.0
    %394 = vmatprep.subr.mxu0 0.0
    %395 = vmatpush1.xpose.msra.mxu0 0.0
    %396 = vmatprep.subr.mxu0 0.0
    %397 = vmatpush1.xpose.msra.mxu0 0.0
    %398 = vmatprep.subr.mxu0 0.0
    %399 = vmatpush1.xpose.msra.mxu0 0.0
    %400 = vmatprep.subr.mxu0 0.0
    %401 = vmatpush1.xpose.msra.mxu0 0.0
    %402 = vmatprep.subr.mxu0 0.0
    %403 = vmatpush1.xpose.msra.mxu0 0.0
    %404 = vmatprep.subr.mxu0 0.0
    %405 = vmatpush1.xpose.msra.mxu0 0.0
    %406 = vmatprep.subr.mxu0 0.0
    %407 = vmatpush1.xpose.msra.mxu0 0.0
    %408 = vmatprep.subr.mxu0 0.0
    %409 = vmatpush1.xpose.msra.mxu0 0.0
    %410 = vmatprep.subr.mxu0 0.0
    %411 = vmatpush1.xpose.msra.mxu0 0.0
    %412 = vmatprep.subr.mxu0 0.0
    %413 = vmatpush1.xpose.msra.mxu0 0.0
    %414 = vmatprep.subr.mxu0 0.0
    %415 = vmatpush1.xpose.msra.mxu0 0.0
    %416 = vmatprep.subr.mxu0 0.0
    %417 = vmatpush1.xpose.msra.mxu0 0.0
    %418 = vmatprep.subr.mxu0 0.0
    %419 = vmatpush1.xpose.msra.mxu0 0.0
    %420 = vmatprep.subr.mxu0 0.0
    %421 = vmatpush1.xpose.msra.mxu0 0.0
    %422 = vmatprep.subr.mxu0 0.0
    %423 = vmatpush1.xpose.msra.mxu0 0.0
    %424 = vmatprep.subr.mxu0 0.0
    %425 = vmatpush1.xpose.msra.mxu0 0.0
    %426 = vmatprep.subr.mxu0 0.0
    %427 = vmatpush1.xpose.msra.mxu0 0.0
    %428 = vmatprep.subr.mxu0 0.0
    %429 = vmatpush1.xpose.msra.mxu0 0.0
    %430 = vmatprep.subr.mxu0 0.0
    %431 = vmatpush1.xpose.msra.mxu0 0.0
    %432 = vmatprep.subr.mxu0 0.0
    %433 = vmatpush1.xpose.msra.mxu0 0.0
    %434 = vmatprep.subr.mxu0 0.0
    %435 = vmatpush1.xpose.msra.mxu0 0.0
    %436 = vmatprep.subr.mxu0 0.0
    %437 = vmatpush1.xpose.msra.mxu0 0.0
    %438 = vmatprep.subr.mxu0 0.0
    %439 = vmatpush1.xpose.msra.mxu0 0.0
    %440 = vmatprep.subr.mxu0 0.0
    %441 = vmatpush1.xpose.msra.mxu0 0.0
    %442 = vmatprep.subr.mxu0 0.0
    %443 = vmatpush1.xpose.msra.mxu0 0.0
    %444 = vmatprep.subr.mxu0 0.0
    %445 = vmatpush1.xpose.msra.mxu0 0.0
    %446 = vmatprep.subr.mxu0 0.0
    %447 = vmatpush1.xpose.msra.mxu0 0.0
    %448 = vmatprep.subr.mxu0 0.0
    %449 = vmatpush1.xpose.msra.mxu0 0.0
    %450 = vmatprep.mubr.f32.mxu0 0.0
    %v451 = vand.u32 %v66, 4294901760
    %452 = vmatmul.mubr.f32.gmra.mrb[0].mxu0 %v451
    %v453 = vpop.f32.mrb[0].mxu0
    %v454 = vadd.f32 %v377, %v453
    %v455 = vpop.f32.mrb[0].mxu0
    %456 = vdwg.mxu0
    %457 = vmatprep.subr.mxu0 0.0
    %v458 = vand.u32 %v66, 4294901760
    %459 = vmatpush1.xpose.msra.mxu0 %v458
    %460 = vmatprep.subr.mxu0 0.0
    %v461 = vand.u32 %v69, 4294901760
    %462 = vmatpush1.xpose.msra.mxu0 %v461
    %463 = vmatprep.subr.mxu0 0.0
    %464 = vmatpush1.xpose.msra.mxu0 0.0
    %465 = vmatprep.subr.mxu0 0.0
    %466 = vmatpush1.xpose.msra.mxu0 0.0
    %467 = vmatprep.subr.mxu0 0.0
    %468 = vmatpush1.xpose.msra.mxu0 0.0
    %469 = vmatprep.subr.mxu0 0.0
    %470 = vmatpush1.xpose.msra.mxu0 0.0
    %471 = vmatprep.subr.mxu0 0.0
    %472 = vmatpush1.xpose.msra.mxu0 0.0
    %473 = vmatprep.subr.mxu0 0.0
    %474 = vmatpush1.xpose.msra.mxu0 0.0
    %475 = vmatprep.subr.mxu0 0.0
    %476 = vmatpush1.xpose.msra.mxu0 0.0
    %477 = vmatprep.subr.mxu0 0.0
    %478 = vmatpush1.xpose.msra.mxu0 0.0
    %479 = vmatprep.subr.mxu0 0.0
    %480 = vmatpush1.xpose.msra.mxu0 0.0
    %481 = vmatprep.subr.mxu0 0.0
    %482 = vmatpush1.xpose.msra.mxu0 0.0
    %483 = vmatprep.subr.mxu0 0.0
    %484 = vmatpush1.xpose.msra.mxu0 0.0
    %485 = vmatprep.subr.mxu0 0.0
    %486 = vmatpush1.xpose.msra.mxu0 0.0
    %487 = vmatprep.subr.mxu0 0.0
    %488 = vmatpush1.xpose.msra.mxu0 0.0
    %489 = vmatprep.subr.mxu0 0.0
    %490 = vmatpush1.xpose.msra.mxu0 0.0
    %491 = vmatprep.subr.mxu0 0.0
    %492 = vmatpush1.xpose.msra.mxu0 0.0
    %493 = vmatprep.subr.mxu0 0.0
    %494 = vmatpush1.xpose.msra.mxu0 0.0
    %495 = vmatprep.subr.mxu0 0.0
    %496 = vmatpush1.xpose.msra.mxu0 0.0
    %497 = vmatprep.subr.mxu0 0.0
    %498 = vmatpush1.xpose.msra.mxu0 0.0
    %499 = vmatprep.subr.mxu0 0.0
    %500 = vmatpush1.xpose.msra.mxu0 0.0
    %501 = vmatprep.subr.mxu0 0.0
    %502 = vmatpush1.xpose.msra.mxu0 0.0
    %503 = vmatprep.subr.mxu0 0.0
    %504 = vmatpush1.xpose.msra.mxu0 0.0
    %505 = vmatprep.subr.mxu0 0.0
    %506 = vmatpush1.xpose.msra.mxu0 0.0
    %507 = vmatprep.subr.mxu0 0.0
    %508 = vmatpush1.xpose.msra.mxu0 0.0
    %509 = vmatprep.subr.mxu0 0.0
    %510 = vmatpush1.xpose.msra.mxu0 0.0
    %511 = vmatprep.subr.mxu0 0.0
    %512 = vmatpush1.xpose.msra.mxu0 0.0
    %513 = vmatprep.subr.mxu0 0.0
    %514 = vmatpush1.xpose.msra.mxu0 0.0
    %515 = vmatprep.subr.mxu0 0.0
    %516 = vmatpush1.xpose.msra.mxu0 0.0
    %517 = vmatprep.subr.mxu0 0.0
    %518 = vmatpush1.xpose.msra.mxu0 0.0
    %519 = vmatprep.subr.mxu0 0.0
    %520 = vmatpush1.xpose.msra.mxu0 0.0
    %521 = vmatprep.subr.mxu0 0.0
    %522 = vmatpush1.xpose.msra.mxu0 0.0
    %523 = vmatprep.mubr.f32.mxu0 0.0
    %v524 = vand.u32 %v66, 4294901760
    %525 = vmatmul.mubr.f32.gmra.mrb[0].mxu0 %v524
    %v526 = vpop.f32.mrb[0].mxu0
    %v527 = vadd.f32 %v454, %v526
    %v528 = vpop.f32.mrb[0].mxu0
    %529 = vdwg.mxu0
    %vm530 = vcmask 130112
    %v531 = vsel %vm530, %v527, -inf
    %532 = vmax.xlane.f32.xlu0 %v531
    %v533 = vpop.xlane.xlu0 %532
    %v534 = vsub.f32 %v527, %v533
    %v535 = vmul.f32 %v534, 1.442695
    %v536 = vpow.pop %v535
    %538 = vrot.lane.b32.xlu0 %v536, 120
    %v539 = vpop.permute.xlu0 %538
    %vm541 = vcmask 64512
    %v542 = vsel %vm541, %v539, 0.0
    %543 = vadd.xlane.f32.xlu0 %v542
    %v544 = vpop.xlane.xlu0 %543
    %v545 = vlog2.pop %v544
    %v546 = vmul.f32 %v545, 0.6931472
    %v547 = vsub.f32 %v534, %v546
    %v548 = vsel %vm541, %v527, -inf
    %549 = vmax.xlane.f32.xlu0 %v548
    %v550 = vpop.xlane.xlu0 %549
    %v551 = vsub.f32 %v527, %v550
    %v552 = vmul.f32 %v551, 1.442695
    %v553 = vpow.pop %v552
    %v554 = vsel %vm541, %v553, 0.0
    %555 = vadd.xlane.f32.xlu0 %v554
    %v556 = vpop.xlane.xlu0 %555
    %v557 = vrcp.pop %v556
    %v558 = vmul.f32 %v553, %v557
    %v559 = vlog2.pop %v556
    %v560 = vmul.f32 %v559, 0.6931472
    %v561 = vsub.f32 %v551, %v560
    %563 = vrot.lane.b32.xlu0 %v547, 120
    %v564 = vpop.permute.xlu0 %563
    %v566 = vsub.f32 %v561, %v564
    %v567 = vmul.f32 %v558, %v566
    %v568 = vsel %vm541, %v567, 0.0
    %569 = vadd.xlane.f32.xlu0 %v568
    %v570 = vpop.xlane.xlu0 %569
    %v571 = vrot.slane %v570, 4
    %v572 = vadd.f32 %v570, %v571
    %v573 = vrot.slane %v572, 2
    %v574 = vadd.f32 %v572, %v573
    %v575 = vrot.slane %v574, 1
    %v576 = vadd.f32 %v574, %v575
    %s577 = vtos %v576
    %s578 = smul.f32 %s577, 0.125
    %v579 = vsub.f32 %v57, %v64
    %v580 = vmul.f32 %v579, %v579
    %v581 = vsel %vm44, %v580, 0.0
    %582 = vadd.xlane.f32.xlu0 %v581
    %v583 = vpop.xlane.xlu0 %582
    %v584 = vrot.slane %v583, 4
    %v585 = vadd.f32 %v583, %v584
    %v586 = vrot.slane %v585, 2
    %v587 = vadd.f32 %v585, %v586
    %v588 = vrot.slane %v587, 1
    %v589 = vadd.f32 %v587, %v588
    %s590 = vtos %v589
    %s591 = smul.f32 %s590, 0.00390625
    %s592 = smul.f32 %s42, %s578
    %s593 = ssub.f32 1.0, %s42
    %s594 = smul.f32 %s593, %s591
    %s595 = sadd.f32 %s592, %s594
    %s596 = scalar_lea.smem [#allocation8], 0
    %597 = sst [smem:[%s596]] %s595
    // Predicated region
    $region22: #{tpu_custom_call.1} parent=1 // pred_check
      _
    $region23: #{tpu_custom_call.1} parent=1 // pred_check_branch
      %599 = sbr.rel (0) target = $region25
    $region24: #{tpu_custom_call.1} parent=1 // pred_region
      %s601 = ssub.s32 16, 16
      %602 = vsyncadd [#allocation5], %s601
      %605 = dma.smem_to_hbm [#allocation8], 16, %s3, [#allocation5]
    $region25: #{tpu_custom_call.1} parent=1 // pred_fallthru
      _
    // Predicated region
    $region26: #{tpu_custom_call.1} parent=1 // pred_check
      _
    $region27: #{tpu_custom_call.1} parent=1 // pred_check_branch
      %607 = sbr.rel (0) target = $region29
    $region28: #{tpu_custom_call.1} parent=1 // pred_region
      %608 = dma.done [#allocation5], 16
    $region29: #{tpu_custom_call.1} parent=1 // pred_fallthru
      _
    %609 = sfence
    %610 = vsyncpa [#allocation4], 1
    %611 = vsyncpa [#allocation7], 1
    %612 = vsyncpa [#allocation5], 1

</llo_original>
